<compile_context>
chip_gen: v7x
topology: tpu7x:2x2x1
jax: 0.10.0
libtpu: 0.0.40
codegen_flags: <defaults>
</compile_context>

<pallas_src>
import jax
import jax.numpy as jnp
from jax.experimental import pallas as pl
from jax.experimental.pallas import tpu as pltpu


def _round_up(n, m):
    return ((n + m - 1) // m) * m


# ---------------------------------------------------------------------------
# Kernel: whole MLP for one batch tile. Weights are resident across grid steps.
# ---------------------------------------------------------------------------
def actuator_net_kernel(x_ref,
                        w1_ref, b1_ref,
                        w2_ref, b2_ref,
                        w3_ref, b3_ref,
                        w4_ref, b4_ref,
                        o_ref):
    def softsign(h):
        # exact |h| (VPU) + approx reciprocal on the EUP slot (f32, v5e-safe)
        return h * pl.reciprocal(1.0 + jnp.abs(h), approx=True)

    x = x_ref[...]  # bf16 (tile_b, in_dim)

    h = jnp.dot(x, w1_ref[...], preferred_element_type=jnp.float32) + b1_ref[...]
    h = softsign(h)
    h = jnp.dot(h.astype(jnp.bfloat16), w2_ref[...],
                preferred_element_type=jnp.float32) + b2_ref[...]
    h = softsign(h)
    h = jnp.dot(h.astype(jnp.bfloat16), w3_ref[...],
                preferred_element_type=jnp.float32) + b3_ref[...]
    h = softsign(h)
    h = jnp.dot(h.astype(jnp.bfloat16), w4_ref[...],
                preferred_element_type=jnp.float32) + b4_ref[...]

    # Lane-sparse (out_dim) store into VMEM is cheap; the HBM writeback stream
    # is 16x smaller than the lane-padded variant.
    o_ref[...] = h.astype(o_ref.dtype)


# ---------------------------------------------------------------------------
# Parameter handling
# ---------------------------------------------------------------------------
def init_params(key, input_dim, output_dim, hidden_size=128):
    """PyTorch-default-style init. W stored as (in, out) (transpose of nn.Linear)."""
    dims = [(input_dim, hidden_size),
            (hidden_size, hidden_size),
            (hidden_size, hidden_size),
            (hidden_size, output_dim)]
    params = []
    for fan_in, fan_out in dims:
        key, kw, kb = jax.random.split(key, 3)
        bound = 1.0 / jnp.sqrt(fan_in)
        w = jax.random.uniform(kw, (fan_in, fan_out), jnp.float32, -bound, bound)
        b = jax.random.uniform(kb, (fan_out,), jnp.float32, -bound, bound)
        params.append((w, b))
    return params


def pack_params(params):
    """Cast weights to bf16 for the MXU; biases to (1, out) f32. No lane padding."""
    packed = []
    for w, b in params:
        packed.append((w.astype(jnp.bfloat16),
                       b.reshape(1, -1).astype(jnp.float32)))
    return packed


# ---------------------------------------------------------------------------
# Tiling choice
# ---------------------------------------------------------------------------
def _choose_tiling(B, max_tile_b):
    if B <= 512:
        # Single small tile; just satisfy the sublane-multiple-of-8 rule.
        tile_b = _round_up(B, 8)
        return tile_b, tile_b
    # Large batch: big tiles to amortize per-step overhead, but always >= 2 grid
    # steps so ("parallel",) can shard across v7x's two TensorCores.
    tile_b = min(max_tile_b, _round_up(pl.cdiv(B, 2), 256))
    b_pad = _round_up(B, tile_b)
    return tile_b, b_pad


# ---------------------------------------------------------------------------
# Wrapper
# ---------------------------------------------------------------------------
def actuator_net_forward(x, packed_params, *, max_tile_b=4096):
    """x: (B, input_dim) float32. packed_params from pack_params()."""
    (w1, b1), (w2, b2), (w3, b3), (w4, b4) = packed_params
    B, in_dim = x.shape
    hidden = w1.shape[1]
    out_dim = w4.shape[1]

    tile_b, b_pad = _choose_tiling(B, max_tile_b)

    x_p = x.astype(jnp.bfloat16)
    if b_pad != B:
        x_p = jnp.pad(x_p, ((0, b_pad - B), (0, 0)))

    grid = (b_pad // tile_b,)

    def resident_spec(arr):
        # Constant block index -> DMA'd once, stays VMEM-resident for all steps.
        return pl.BlockSpec(arr.shape, lambda i: (0, 0))

    x_spec = pl.BlockSpec((tile_b, in_dim), lambda i: (i, 0))
    out_spec = pl.BlockSpec((tile_b, out_dim), lambda i: (i, 0))

    # Cost hint for XLA scheduling around the custom call.
    flops = 2 * b_pad * (in_dim * hidden + 2 * hidden * hidden + hidden * out_dim)
    param_bytes = sum(int(w.size) * 2 + int(b.size) * 4 for w, b in packed_params)
    bytes_accessed = int(x_p.size) * 2 + b_pad * out_dim * 4 + param_bytes
    cost = pl.CostEstimate(flops=flops,
                           transcendentals=3 * b_pad * hidden,
                           bytes_accessed=bytes_accessed)

    # Explicit VMEM budget: double-buffered x/out blocks + resident params +
    # generous headroom for f32/bf16 intermediates inside the body. Raised above
    # the v5e (16 MiB) / v6e (32 MiB) scoped defaults, capped safely under the
    # 64 MiB per-TC physical VMEM of v7x.
    vmem_est = (2 * tile_b * in_dim * 2            # x blocks (bf16)
                + 2 * tile_b * out_dim * 4         # out blocks (f32)
                + 2 * param_bytes                  # resident weights/biases
                + 6 * tile_b * hidden * 4)         # intermediate headroom
    vmem_limit = int(min(48 << 20, max(24 << 20, 2 * vmem_est)))

    out = pl.pallas_call(
        actuator_net_kernel,
        out_shape=jax.ShapeDtypeStruct((b_pad, out_dim), jnp.float32),
        grid=grid,
        in_specs=[x_spec,
                  resident_spec(w1), resident_spec(b1),
                  resident_spec(w2), resident_spec(b2),
                  resident_spec(w3), resident_spec(b3),
                  resident_spec(w4), resident_spec(b4)],
        out_specs=out_spec,
        compiler_params=pltpu.CompilerParams(
            dimension_semantics=("parallel",),
            vmem_limit_bytes=vmem_limit),
        cost_estimate=cost,
    )(x_p, w1, b1, w2, b2, w3, b3, w4, b4)

    return out if b_pad == B else out[:B]


# ---------------------------------------------------------------------------
# Pure-JAX f32 reference (faithful to the PyTorch module)
# ---------------------------------------------------------------------------
def reference_forward(x, params):
    h = x
    for i, (w, b) in enumerate(params):
        h = h @ w + b
        if i < len(params) - 1:
            h = h / (1.0 + jnp.abs(h))
    return h


if __name__ == "__main__":
    key = jax.random.PRNGKey(0)
    key, kx = jax.random.split(key)

    # Small shapes; batch not a multiple of 8 exercises the padding path.
    batch, input_dim, output_dim, hidden = 37, 16, 8, 128
    x = jax.random.normal(kx, (batch, input_dim), jnp.float32)

    params = init_params(key, input_dim, output_dim, hidden)
    packed = pack_params(params)

    out = actuator_net_forward(x, packed)
    out = jax.block_until_ready(out)

    ref = reference_forward(x, params)
    assert out.shape == (batch, output_dim), out.shape
    # Tolerance loosened: bf16 MXU operands + approx (EUP) reciprocal in softsign.
    assert jnp.allclose(out, ref, atol=3e-2, rtol=3e-2), float(jnp.max(jnp.abs(out - ref)))

    print("KERNEL_OK")
</pallas_src>

<mosaic_0001>
module attributes {stable_mosaic.version = 11 : i64} {
  func.func @actuator_net_kernel(%arg0: i32, %arg1: memref<40x16xbf16, #tpu.memory_space<vmem>>, %arg2: memref<16x128xbf16, #tpu.memory_space<vmem>>, %arg3: memref<1x128xf32, #tpu.memory_space<vmem>>, %arg4: memref<128x128xbf16, #tpu.memory_space<vmem>>, %arg5: memref<1x128xf32, #tpu.memory_space<vmem>>, %arg6: memref<128x128xbf16, #tpu.memory_space<vmem>>, %arg7: memref<1x128xf32, #tpu.memory_space<vmem>>, %arg8: memref<128x8xbf16, #tpu.memory_space<vmem>>, %arg9: memref<1x8xf32, #tpu.memory_space<vmem>>, %arg10: memref<40x8xf32, #tpu.memory_space<vmem>>) attributes {dimension_semantics = [#tpu.dimension_semantics<parallel>], iteration_bounds = array<i64: 1>, scalar_prefetch = 0 : i64, scratch_operands = 0 : i64, tpu.core_type = #tpu.core_type<tc>, window_params = [{transform_indices = @transform_0, window_bounds = array<i64: 40, 16>}, {pipeline_mode = #tpu.pipeline_mode<synchronous>, transform_indices = @transform_1, window_bounds = array<i64: 16, 128>}, {pipeline_mode = #tpu.pipeline_mode<synchronous>, transform_indices = @transform_2, window_bounds = array<i64: 1, 128>}, {pipeline_mode = #tpu.pipeline_mode<synchronous>, transform_indices = @transform_3, window_bounds = array<i64: 128, 128>}, {pipeline_mode = #tpu.pipeline_mode<synchronous>, transform_indices = @transform_4, window_bounds = array<i64: 1, 128>}, {pipeline_mode = #tpu.pipeline_mode<synchronous>, transform_indices = @transform_5, window_bounds = array<i64: 128, 128>}, {pipeline_mode = #tpu.pipeline_mode<synchronous>, transform_indices = @transform_6, window_bounds = array<i64: 1, 128>}, {pipeline_mode = #tpu.pipeline_mode<synchronous>, transform_indices = @transform_7, window_bounds = array<i64: 128, 8>}, {pipeline_mode = #tpu.pipeline_mode<synchronous>, transform_indices = @transform_8, window_bounds = array<i64: 1, 8>}, {transform_indices = @transform_9, window_bounds = array<i64: 40, 8>}]} {
    %c0 = arith.constant 0 : index
    %c0_0 = arith.constant 0 : index
    %0 = vector.load %arg1[%c0, %c0_0] : memref<40x16xbf16, #tpu.memory_space<vmem>>, vector<40x16xbf16>
    %c0_1 = arith.constant 0 : index
    %c0_2 = arith.constant 0 : index
    %1 = vector.load %arg2[%c0_1, %c0_2] : memref<16x128xbf16, #tpu.memory_space<vmem>>, vector<16x128xbf16>
    %cst = arith.constant dense<0.000000e+00> : vector<40x128xf32>
    %2 = tpu.matmul %0, %1, %cst {dimension_numbers = #tpu.dot_dimension_numbers<[1], [0], [0], [1], [0, 0, 1, 1], [], []>} : vector<40x16xbf16>, vector<16x128xbf16>, vector<40x128xf32> -> vector<40x128xf32>
    %c0_3 = arith.constant 0 : index
    %c0_4 = arith.constant 0 : index
    %3 = vector.load %arg3[%c0_3, %c0_4] : memref<1x128xf32, #tpu.memory_space<vmem>>, vector<1x128xf32>
    %4 = vector.broadcast %3 : vector<1x128xf32> to vector<40x128xf32>
    %5 = arith.addf %2, %4 : vector<40x128xf32>
    %6 = math.absf %5 : vector<40x128xf32>
    %cst_5 = arith.constant 1.000000e+00 : f32
    %7 = vector.broadcast %cst_5 : f32 to vector<40x128xf32>
    %8 = arith.addf %7, %6 : vector<40x128xf32>
    %9 = tpu.reciprocal %8 {approx = true} : vector<40x128xf32> -> vector<40x128xf32>
    %10 = arith.mulf %5, %9 : vector<40x128xf32>
    %11 = arith.truncf %10 : vector<40x128xf32> to vector<40x128xbf16>
    %c0_6 = arith.constant 0 : index
    %c0_7 = arith.constant 0 : index
    %12 = vector.load %arg4[%c0_6, %c0_7] : memref<128x128xbf16, #tpu.memory_space<vmem>>, vector<128x128xbf16>
    %cst_8 = arith.constant dense<0.000000e+00> : vector<40x128xf32>
    %13 = tpu.matmul %11, %12, %cst_8 {dimension_numbers = #tpu.dot_dimension_numbers<[1], [0], [0], [1], [0, 0, 1, 1], [], []>} : vector<40x128xbf16>, vector<128x128xbf16>, vector<40x128xf32> -> vector<40x128xf32>
    %c0_9 = arith.constant 0 : index
    %c0_10 = arith.constant 0 : index
    %14 = vector.load %arg5[%c0_9, %c0_10] : memref<1x128xf32, #tpu.memory_space<vmem>>, vector<1x128xf32>
    %15 = vector.broadcast %14 : vector<1x128xf32> to vector<40x128xf32>
    %16 = arith.addf %13, %15 : vector<40x128xf32>
    %17 = math.absf %16 : vector<40x128xf32>
    %cst_11 = arith.constant 1.000000e+00 : f32
    %18 = vector.broadcast %cst_11 : f32 to vector<40x128xf32>
    %19 = arith.addf %18, %17 : vector<40x128xf32>
    %20 = tpu.reciprocal %19 {approx = true} : vector<40x128xf32> -> vector<40x128xf32>
    %21 = arith.mulf %16, %20 : vector<40x128xf32>
    %22 = arith.truncf %21 : vector<40x128xf32> to vector<40x128xbf16>
    %c0_12 = arith.constant 0 : index
    %c0_13 = arith.constant 0 : index
    %23 = vector.load %arg6[%c0_12, %c0_13] : memref<128x128xbf16, #tpu.memory_space<vmem>>, vector<128x128xbf16>
    %cst_14 = arith.constant dense<0.000000e+00> : vector<40x128xf32>
    %24 = tpu.matmul %22, %23, %cst_14 {dimension_numbers = #tpu.dot_dimension_numbers<[1], [0], [0], [1], [0, 0, 1, 1], [], []>} : vector<40x128xbf16>, vector<128x128xbf16>, vector<40x128xf32> -> vector<40x128xf32>
    %c0_15 = arith.constant 0 : index
    %c0_16 = arith.constant 0 : index
    %25 = vector.load %arg7[%c0_15, %c0_16] : memref<1x128xf32, #tpu.memory_space<vmem>>, vector<1x128xf32>
    %26 = vector.broadcast %25 : vector<1x128xf32> to vector<40x128xf32>
    %27 = arith.addf %24, %26 : vector<40x128xf32>
    %28 = math.absf %27 : vector<40x128xf32>
    %cst_17 = arith.constant 1.000000e+00 : f32
    %29 = vector.broadcast %cst_17 : f32 to vector<40x128xf32>
    %30 = arith.addf %29, %28 : vector<40x128xf32>
    %31 = tpu.reciprocal %30 {approx = true} : vector<40x128xf32> -> vector<40x128xf32>
    %32 = arith.mulf %27, %31 : vector<40x128xf32>
    %33 = arith.truncf %32 : vector<40x128xf32> to vector<40x128xbf16>
    %c0_18 = arith.constant 0 : index
    %c0_19 = arith.constant 0 : index
    %34 = vector.load %arg8[%c0_18, %c0_19] : memref<128x8xbf16, #tpu.memory_space<vmem>>, vector<128x8xbf16>
    %cst_20 = arith.constant dense<0.000000e+00> : vector<40x8xf32>
    %35 = tpu.matmul %33, %34, %cst_20 {dimension_numbers = #tpu.dot_dimension_numbers<[1], [0], [0], [1], [0, 0, 1, 1], [], []>} : vector<40x128xbf16>, vector<128x8xbf16>, vector<40x8xf32> -> vector<40x8xf32>
    %c0_21 = arith.constant 0 : index
    %c0_22 = arith.constant 0 : index
    %36 = vector.load %arg9[%c0_21, %c0_22] : memref<1x8xf32, #tpu.memory_space<vmem>>, vector<1x8xf32>
    %37 = vector.broadcast %36 : vector<1x8xf32> to vector<40x8xf32>
    %38 = arith.addf %35, %37 : vector<40x8xf32>
    %c0_23 = arith.constant 0 : index
    %c0_24 = arith.constant 0 : index
    %39 = vector.load %arg10[%c0_23, %c0_24] : memref<40x8xf32, #tpu.memory_space<vmem>>, vector<40x8xf32>
    tpu.vector_store %arg10[%c0_23, %c0_24], %38 {strides = array<i32>} : memref<40x8xf32, #tpu.memory_space<vmem>>, vector<40x8xf32>,
    return
  }
  func.func @transform_0(%arg0: i32) -> (i32, i32) {
    %c0_i32 = arith.constant 0 : i32
    %c0_i32_0 = arith.constant 0 : i32
    return %arg0, %c0_i32 : i32, i32
  }
  func.func @transform_1(%arg0: i32) -> (i32, i32) {
    %c0_i32 = arith.constant 0 : i32
    %c0_i32_0 = arith.constant 0 : i32
    %c0_i32_1 = arith.constant 0 : i32
    return %c0_i32, %c0_i32_0 : i32, i32
  }
  func.func @transform_2(%arg0: i32) -> (i32, i32) {
    %c0_i32 = arith.constant 0 : i32
    %c0_i32_0 = arith.constant 0 : i32
    %c0_i32_1 = arith.constant 0 : i32
    return %c0_i32, %c0_i32_0 : i32, i32
  }
  func.func @transform_3(%arg0: i32) -> (i32, i32) {
    %c0_i32 = arith.constant 0 : i32
    %c0_i32_0 = arith.constant 0 : i32
    %c0_i32_1 = arith.constant 0 : i32
    return %c0_i32, %c0_i32_0 : i32, i32
  }
  func.func @transform_4(%arg0: i32) -> (i32, i32) {
    %c0_i32 = arith.constant 0 : i32
    %c0_i32_0 = arith.constant 0 : i32
    %c0_i32_1 = arith.constant 0 : i32
    return %c0_i32, %c0_i32_0 : i32, i32
  }
  func.func @transform_5(%arg0: i32) -> (i32, i32) {
    %c0_i32 = arith.constant 0 : i32
    %c0_i32_0 = arith.constant 0 : i32
    %c0_i32_1 = arith.constant 0 : i32
    return %c0_i32, %c0_i32_0 : i32, i32
  }
  func.func @transform_6(%arg0: i32) -> (i32, i32) {
    %c0_i32 = arith.constant 0 : i32
    %c0_i32_0 = arith.constant 0 : i32
    %c0_i32_1 = arith.constant 0 : i32
    return %c0_i32, %c0_i32_0 : i32, i32
  }
  func.func @transform_7(%arg0: i32) -> (i32, i32) {
    %c0_i32 = arith.constant 0 : i32
    %c0_i32_0 = arith.constant 0 : i32
    %c0_i32_1 = arith.constant 0 : i32
    return %c0_i32, %c0_i32_0 : i32, i32
  }
  func.func @transform_8(%arg0: i32) -> (i32, i32) {
    %c0_i32 = arith.constant 0 : i32
    %c0_i32_0 = arith.constant 0 : i32
    %c0_i32_1 = arith.constant 0 : i32
    return %c0_i32, %c0_i32_0 : i32, i32
  }
  func.func @transform_9(%arg0: i32) -> (i32, i32) {
    %c0_i32 = arith.constant 0 : i32
    %c0_i32_0 = arith.constant 0 : i32
    return %arg0, %c0_i32 : i32, i32
  }
}

</mosaic_0001>

<llo_original>
// kernel: tpu_custom_call.1
$region0: #{tpu_custom_call.1}
  #allocation0 [shape = 'u32[]', space=smem, size = 0x4, offset = 0x4, fixed_abs, tag = 'smem constant byte address 0x4 - core index']
  #allocation1 [shape = 'u32[144,128]{1,0:T(1,128)}', space=vmem, size = 0x12000, scoped, tag = 'internal scratch']
  %s0 = inlined_call_operand.vmem [shape: bf16[40,16], index: 0, kind: input, shape index: {}]
  %s1 = inlined_call_operand.vmem [shape: bf16[16,128], index: 1, kind: input, shape index: {}]
  %s2 = inlined_call_operand.vmem [shape: f32[1,128], index: 2, kind: input, shape index: {}]
  %s3 = inlined_call_operand.vmem [shape: bf16[128,128], index: 3, kind: input, shape index: {}]
  %s4 = inlined_call_operand.vmem [shape: f32[1,128], index: 4, kind: input, shape index: {}]
  %s5 = inlined_call_operand.hbm [shape: bf16[128,128], index: 5, kind: input, shape index: {}]
  %s6 = inlined_call_operand.vmem [shape: f32[1,128], index: 6, kind: input, shape index: {}]
  %s7 = inlined_call_operand.vmem [shape: bf16[128,8], index: 7, kind: input, shape index: {}]
  %s8 = inlined_call_operand.vmem [shape: f32[1,8], index: 8, kind: input, shape index: {}]
  %s9 = inlined_call_operand.vmem [shape: f32[40,8], index: 9, kind: output, shape index: {}]
  %s10 = sld [smem:[#allocation0]]
  $region50: #{tpu_custom_call.1} parent=0
    _
  %s12 = ssub.s32 1, %s10
  %s13 = scalar_select 0, %s12, %s10
  $region1: #{tpu_custom_call.1} parent=0
    #allocation2 [shape = 'u8[32768]{0}', space=vmem, size = 0x8000, scoped, tag = 'input window, operand 5, single buffered']
    #allocation3 [shape = 's32[1]{0}', space=sflag, size = 0x4, scoped, tag = 'scoped memory for tpu_custom_call.1']
    %14 = vsyncpa [#allocation3], 0
    // Predicated region
    $region2: #{tpu_custom_call.1} parent=1 // pred_check
      _
    $region3: #{tpu_custom_call.1} parent=1 // pred_check_branch
      %16 = sbr.rel (0) target = $region5
    $region4: #{tpu_custom_call.1} parent=1 // pred_region
      _
    $region5: #{tpu_custom_call.1} parent=1 // pred_fallthru
      _
    // Predicated region
    $region6: #{tpu_custom_call.1} parent=1 // pred_check
      _
    $region7: #{tpu_custom_call.1} parent=1 // pred_check_branch
      %18 = sbr.rel (0) target = $region9
    $region8: #{tpu_custom_call.1} parent=1 // pred_region
      _
    $region9: #{tpu_custom_call.1} parent=1 // pred_fallthru
      _
    // Predicated region
    $region10: #{tpu_custom_call.1} parent=1 // pred_check
      _
    $region11: #{tpu_custom_call.1} parent=1 // pred_check_branch
      %20 = sbr.rel (0) target = $region13
    $region12: #{tpu_custom_call.1} parent=1 // pred_region
      _
    $region13: #{tpu_custom_call.1} parent=1 // pred_fallthru
      _
    // Predicated region
    $region14: #{tpu_custom_call.1} parent=1 // pred_check
      _
    $region15: #{tpu_custom_call.1} parent=1 // pred_check_branch
      %22 = sbr.rel (0) target = $region17
    $region16: #{tpu_custom_call.1} parent=1 // pred_region
      _
    $region17: #{tpu_custom_call.1} parent=1 // pred_fallthru
      _
    // Predicated region
    $region18: #{tpu_custom_call.1} parent=1 // pred_check
      _
    $region19: #{tpu_custom_call.1} parent=1 // pred_check_branch
      %24 = sbr.rel (0) target = $region21
    $region20: #{tpu_custom_call.1} parent=1 // pred_region
      _
    $region21: #{tpu_custom_call.1} parent=1 // pred_fallthru
      _
    // Predicated region
    $region22: #{tpu_custom_call.1} parent=1 // pred_check
      _
    $region23: #{tpu_custom_call.1} parent=1 // pred_check_branch
      %26 = sbr.rel (0) target = $region25
    $region24: #{tpu_custom_call.1} parent=1 // pred_region
      %s28 = ssub.s32 1024, 1024
      %29 = vsyncadd [#allocation3], %s28
      %s30 = sshll.u32 [#allocation2], 4
      %s31 = int_to_ptr.vmem [resolvable:$true] %s30
      %36 = dma.hbm_to_vmem [thread:$0]  %s5, 1024, %s31, [#allocation3], 64, 64, 4
    $region25: #{tpu_custom_call.1} parent=1 // pred_fallthru
      _
    // Predicated region
    $region26: #{tpu_custom_call.1} parent=1 // pred_check
      _
    $region27: #{tpu_custom_call.1} parent=1 // pred_check_branch
      %38 = sbr.rel (0) target = $region29
    $region28: #{tpu_custom_call.1} parent=1 // pred_region
      _
    $region29: #{tpu_custom_call.1} parent=1 // pred_fallthru
      _
    // Predicated region
    $region30: #{tpu_custom_call.1} parent=1 // pred_check
      _
    $region31: #{tpu_custom_call.1} parent=1 // pred_check_branch
      %40 = sbr.rel (0) target = $region33
    $region32: #{tpu_custom_call.1} parent=1 // pred_region
      _
    $region33: #{tpu_custom_call.1} parent=1 // pred_fallthru
      _
    // Predicated region
    $region34: #{tpu_custom_call.1} parent=1 // pred_check
      _
    $region35: #{tpu_custom_call.1} parent=1 // pred_check_branch
      %42 = sbr.rel (0) target = $region37
    $region36: #{tpu_custom_call.1} parent=1 // pred_region
      _
    $region37: #{tpu_custom_call.1} parent=1 // pred_fallthru
      _
    // Predicated region
    $region38: #{tpu_custom_call.1} parent=1 // pred_check
      _
    $region39: #{tpu_custom_call.1} parent=1 // pred_check_branch
      %44 = sbr.rel (0) target = $region41
    $region40: #{tpu_custom_call.1} parent=1 // pred_region
      %45 = dma.done [#allocation3], 1024
    $region41: #{tpu_custom_call.1} parent=1 // pred_fallthru
      _
    %v47 = vld [vmem:[%s0] sm:$0xf]
    %v48 = vld [vmem:[%s0 + $0x4] sm:$0xf]
    %v49 = vld [vmem:[%s0 + $0x8] sm:$0xf]
    %v50 = vld [vmem:[%s0 + $0xc] sm:$0xf]
    %v51 = vld [vmem:[%s0 + $0x10] sm:$0xf]
    %v52 = vld [vmem:[%s1] sm:$0xf]
    %v53 = vld [vmem:[%s1 + $0x4] sm:$0xf]
    %v54 = vld [vmem:[%s2] sm:$0x1]
    %v56 = vlaneseq
    %v57 = vshrl.u32 %v56, 7
    %v58 = vsub.s32 0, %v57
    %v59 = vrot.slane %v54, %v58
    %v66 = vunpack.c.l.b16 %v47
    %v67 = vunpack.c.l.b16 %v48
    %v68 = vunpack.c.l.b16 %v49
    %v69 = vunpack.c.l.b16 %v50
    %v70 = vunpack.c.l.b16 %v51
    %v71 = vpack.c.b16 %v67, %v66
    %v72 = vpack.c.b16 %v69, %v68
    %v73 = vpack.c.b16 %v70, %v70
    %v76 = vunpack.c.l.b16 %v52
    %v77 = vunpack.c.l.b16 %v53
    %v78 = vpack.c.b16 %v77, %v76
    %vm80 = vcmask 130048
    %v82 = vsel %vm80, %v71, 0
    %v85 = vsel %vm80, %v72, 0
    %v88 = vsel %vm80, %v73, 0
    %90 = vmatprep.subr.bf16.mxu0 0
    %91 = vmatpush1.bf16.msra.mxu0 %v78
    %92 = vmatprep.subr.bf16.mxu0 0
    %93 = vmatpush1.bf16.msra.mxu0 0
    %94 = vmatprep.subr.bf16.mxu0 0
    %95 = vmatpush1.bf16.msra.mxu0 0
    %96 = vmatprep.subr.bf16.mxu0 0
    %97 = vmatpush1.bf16.msra.mxu0 0
    %98 = vmatprep.subr.bf16.mxu0 0
    %99 = vmatpush1.bf16.msra.mxu0 0
    %100 = vmatprep.subr.bf16.mxu0 0
    %101 = vmatpush1.bf16.msra.mxu0 0
    %102 = vmatprep.subr.bf16.mxu0 0
    %103 = vmatpush1.bf16.msra.mxu0 0
    %104 = vmatprep.subr.bf16.mxu0 0
    %105 = vmatpush1.bf16.msra.mxu0 0
    %106 = vmatprep.subr.bf16.mxu0 0
    %107 = vmatpush1.bf16.msra.mxu0 0
    %108 = vmatprep.subr.bf16.mxu0 0
    %109 = vmatpush1.bf16.msra.mxu0 0
    %110 = vmatprep.subr.bf16.mxu0 0
    %111 = vmatpush1.bf16.msra.mxu0 0
    %112 = vmatprep.subr.bf16.mxu0 0
    %113 = vmatpush1.bf16.msra.mxu0 0
    %114 = vmatprep.subr.bf16.mxu0 0
    %115 = vmatpush1.bf16.msra.mxu0 0
    %116 = vmatprep.subr.bf16.mxu0 0
    %117 = vmatpush1.bf16.msra.mxu0 0
    %118 = vmatprep.subr.bf16.mxu0 0
    %119 = vmatpush1.bf16.msra.mxu0 0
    %120 = vmatprep.subr.bf16.mxu0 0
    %121 = vmatpush1.bf16.msra.mxu0 0
    %122 = vmatprep.mubr.bf16.mxu0 0
    %123 = vmatmul.mubr.bf16.gmra.mrb[0].mxu0 %v82
    %v124 = vpop.f32.mrb[0].mxu0
    %v125 = vadd.f32 %v59, %v124
    %v126 = vpop.f32.mrb[0].mxu0
    %v127 = vpop.f32.mrb[0].mxu0
    %v128 = vadd.f32 %v59, %v127
    %v129 = vpop.f32.mrb[0].mxu0
    %130 = vmatprep.mubr.bf16.mxu0 0
    %131 = vmatmul.mubr.bf16.gmra.mrb[0].mxu0 %v85
    %v132 = vpop.f32.mrb[0].mxu0
    %v133 = vadd.f32 %v59, %v132
    %v134 = vpop.f32.mrb[0].mxu0
    %v135 = vpop.f32.mrb[0].mxu0
    %v136 = vadd.f32 %v59, %v135
    %v137 = vpop.f32.mrb[0].mxu0
    %138 = vmatprep.mubr.bf16.mxu0 0
    %139 = vmatmul.mubr.bf16.gmra.mrb[0].mxu0 %v88
    %v140 = vpop.f32.mrb[0].mxu0
    %v141 = vadd.f32 %v59, %v140
    %v142 = vpop.f32.mrb[0].mxu0
    %v143 = vpop.f32.mrb[0].mxu0
    %v144 = vpop.f32.mrb[0].mxu0
    %145 = vdwg.mxu0
    %v146 = vand.u32 2147483647, %v125
    %v147 = vand.u32 2147483647, %v128
    %v148 = vand.u32 2147483647, %v133
    %v149 = vand.u32 2147483647, %v136
    %v150 = vand.u32 2147483647, %v141
    %v151 = vadd.f32 %v146, 1.0
    %v152 = vadd.f32 %v147, 1.0
    %v153 = vadd.f32 %v148, 1.0
    %v154 = vadd.f32 %v149, 1.0
    %v155 = vadd.f32 %v150, 1.0
    %v156 = vrcp.pop %v151
    %v157 = vrcp.pop %v152
    %v158 = vrcp.pop %v153
    %v159 = vrcp.pop %v154
    %v160 = vrcp.pop %v155
    %v161 = vmul.f32 %v125, %v156
    %v162 = vmul.f32 %v128, %v157
    %v163 = vmul.f32 %v133, %v158
    %v164 = vmul.f32 %v136, %v159
    %v165 = vmul.f32 %v141, %v160
    %v166 = vpack.c.bf16 %v162, %v161
    %v167 = vpack.c.bf16 %v164, %v163
    %v168 = vpack.c.bf16 %v165, %v165
    %v169 = vld [vmem:[%s3] sm:$0xf]
    %v170 = vld [vmem:[%s3 + $0x4] sm:$0xf]
    %v171 = vld [vmem:[%s3 + $0x8] sm:$0xf]
    %v172 = vld [vmem:[%s3 + $0xc] sm:$0xf]
    %v173 = vld [vmem:[%s3 + $0x10] sm:$0xf]
    %v174 = vld [vmem:[%s3 + $0x14] sm:$0xf]
    %v175 = vld [vmem:[%s3 + $0x18] sm:$0xf]
    %v176 = vld [vmem:[%s3 + $0x1c] sm:$0xf]
    %v177 = vld [vmem:[%s3 + $0x20] sm:$0xf]
    %v178 = vld [vmem:[%s3 + $0x24] sm:$0xf]
    %v179 = vld [vmem:[%s3 + $0x28] sm:$0xf]
    %v180 = vld [vmem:[%s3 + $0x2c] sm:$0xf]
    %v181 = vld [vmem:[%s3 + $0x30] sm:$0xf]
    %v182 = vld [vmem:[%s3 + $0x34] sm:$0xf]
    %v183 = vld [vmem:[%s3 + $0x38] sm:$0xf]
    %v184 = vld [vmem:[%s3 + $0x3c] sm:$0xf]
    %v185 = vld [vmem:[%s4] sm:$0x1]
    %v187 = vlaneseq
    %v188 = vshrl.u32 %v187, 7
    %v189 = vsub.s32 0, %v188
    %v190 = vrot.slane %v185, %v189
    %v208 = vunpack.c.l.b16 %v169
    %v209 = vunpack.c.l.b16 %v170
    %v210 = vunpack.c.l.b16 %v171
    %v211 = vunpack.c.l.b16 %v172
    %v212 = vunpack.c.l.b16 %v173
    %v213 = vunpack.c.l.b16 %v174
    %v214 = vunpack.c.l.b16 %v175
    %v215 = vunpack.c.l.b16 %v176
    %v216 = vunpack.c.l.b16 %v177
    %v217 = vunpack.c.l.b16 %v178
    %v218 = vunpack.c.l.b16 %v179
    %v219 = vunpack.c.l.b16 %v180
    %v220 = vunpack.c.l.b16 %v181
    %v221 = vunpack.c.l.b16 %v182
    %v222 = vunpack.c.l.b16 %v183
    %v223 = vunpack.c.l.b16 %v184
    %v224 = vpack.c.b16 %v209, %v208
    %v225 = vpack.c.b16 %v211, %v210
    %v226 = vpack.c.b16 %v213, %v212
    %v227 = vpack.c.b16 %v215, %v214
    %v228 = vpack.c.b16 %v217, %v216
    %v229 = vpack.c.b16 %v219, %v218
    %v230 = vpack.c.b16 %v221, %v220
    %v231 = vpack.c.b16 %v223, %v222
    %240 = vmatprep.subr.bf16.mxu0 0
    %241 = vmatpush1.bf16.msra.mxu0 %v224
    %242 = vmatprep.subr.bf16.mxu0 0
    %243 = vmatpush1.bf16.msra.mxu0 %v225
    %244 = vmatprep.subr.bf16.mxu0 0
    %245 = vmatpush1.bf16.msra.mxu0 %v226
    %246 = vmatprep.subr.bf16.mxu0 0
    %247 = vmatpush1.bf16.msra.mxu0 %v227
    %248 = vmatprep.subr.bf16.mxu0 0
    %249 = vmatpush1.bf16.msra.mxu0 %v228
    %250 = vmatprep.subr.bf16.mxu0 0
    %251 = vmatpush1.bf16.msra.mxu0 %v229
    %252 = vmatprep.subr.bf16.mxu0 0
    %253 = vmatpush1.bf16.msra.mxu0 %v230
    %254 = vmatprep.subr.bf16.mxu0 0
    %255 = vmatpush1.bf16.msra.mxu0 %v231
    %256 = vmatprep.subr.bf16.mxu0 0
    %257 = vmatpush1.bf16.msra.mxu0 0
    %258 = vmatprep.subr.bf16.mxu0 0
    %259 = vmatpush1.bf16.msra.mxu0 0
    %260 = vmatprep.subr.bf16.mxu0 0
    %261 = vmatpush1.bf16.msra.mxu0 0
    %262 = vmatprep.subr.bf16.mxu0 0
    %263 = vmatpush1.bf16.msra.mxu0 0
    %264 = vmatprep.subr.bf16.mxu0 0
    %265 = vmatpush1.bf16.msra.mxu0 0
    %266 = vmatprep.subr.bf16.mxu0 0
    %267 = vmatpush1.bf16.msra.mxu0 0
    %268 = vmatprep.subr.bf16.mxu0 0
    %269 = vmatpush1.bf16.msra.mxu0 0
    %270 = vmatprep.subr.bf16.mxu0 0
    %271 = vmatpush1.bf16.msra.mxu0 0
    %272 = vmatprep.mubr.bf16.mxu0 0
    %273 = vmatmul.mubr.bf16.gmra.mrb[0].mxu0 %v166
    %v274 = vpop.f32.mrb[0].mxu0
    %v275 = vadd.f32 %v190, %v274
    %v276 = vpop.f32.mrb[0].mxu0
    %v277 = vpop.f32.mrb[0].mxu0
    %v278 = vadd.f32 %v190, %v277
    %v279 = vpop.f32.mrb[0].mxu0
    %280 = vmatprep.mubr.bf16.mxu0 0
    %281 = vmatmul.mubr.bf16.gmra.mrb[0].mxu0 %v167
    %v282 = vpop.f32.mrb[0].mxu0
    %v283 = vadd.f32 %v190, %v282
    %v284 = vpop.f32.mrb[0].mxu0
    %v285 = vpop.f32.mrb[0].mxu0
    %v286 = vadd.f32 %v190, %v285
    %v287 = vpop.f32.mrb[0].mxu0
    %288 = vmatprep.mubr.bf16.mxu0 0
    %289 = vmatmul.mubr.bf16.gmra.mrb[0].mxu0 %v168
    %v290 = vpop.f32.mrb[0].mxu0
    %v291 = vadd.f32 %v190, %v290
    %v292 = vpop.f32.mrb[0].mxu0
    %v293 = vpop.f32.mrb[0].mxu0
    %v294 = vpop.f32.mrb[0].mxu0
    %295 = vdwg.mxu0
    %v296 = vand.u32 2147483647, %v275
    %v297 = vand.u32 2147483647, %v278
    %v298 = vand.u32 2147483647, %v283
    %v299 = vand.u32 2147483647, %v286
    %v300 = vand.u32 2147483647, %v291
    %v301 = vadd.f32 %v296, 1.0
    %v302 = vadd.f32 %v297, 1.0
    %v303 = vadd.f32 %v298, 1.0
    %v304 = vadd.f32 %v299, 1.0
    %v305 = vadd.f32 %v300, 1.0
    %v306 = vrcp.pop %v301
    %v307 = vrcp.pop %v302
    %v308 = vrcp.pop %v303
    %v309 = vrcp.pop %v304
    %v310 = vrcp.pop %v305
    %v311 = vmul.f32 %v275, %v306
    %v312 = vmul.f32 %v278, %v307
    %v313 = vmul.f32 %v283, %v308
    %v314 = vmul.f32 %v286, %v309
    %v315 = vmul.f32 %v291, %v310
    %v316 = vpack.c.bf16 %v312, %v311
    %v317 = vpack.c.bf16 %v314, %v313
    %v318 = vpack.c.bf16 %v315, %v315
    %v319 = vld [vmem:[#allocation2] sm:$0xf]
    %v320 = vld [vmem:[#allocation2 + $0x4] sm:$0xf]
    %v321 = vld [vmem:[#allocation2 + $0x8] sm:$0xf]
    %v322 = vld [vmem:[#allocation2 + $0xc] sm:$0xf]
    %v323 = vld [vmem:[#allocation2 + $0x10] sm:$0xf]
    %v324 = vld [vmem:[#allocation2 + $0x14] sm:$0xf]
    %v325 = vld [vmem:[#allocation2 + $0x18] sm:$0xf]
    %v326 = vld [vmem:[#allocation2 + $0x1c] sm:$0xf]
    %v327 = vld [vmem:[#allocation2 + $0x20] sm:$0xf]
    %v328 = vld [vmem:[#allocation2 + $0x24] sm:$0xf]
    %v329 = vld [vmem:[#allocation2 + $0x28] sm:$0xf]
    %v330 = vld [vmem:[#allocation2 + $0x2c] sm:$0xf]
    %v331 = vld [vmem:[#allocation2 + $0x30] sm:$0xf]
    %v332 = vld [vmem:[#allocation2 + $0x34] sm:$0xf]
    %v333 = vld [vmem:[#allocation2 + $0x38] sm:$0xf]
    %v334 = vld [vmem:[#allocation2 + $0x3c] sm:$0xf]
    %v335 = vld [vmem:[%s6] sm:$0x1]
    %v337 = vlaneseq
    %v338 = vshrl.u32 %v337, 7
    %v339 = vsub.s32 0, %v338
    %v340 = vrot.slane %v335, %v339
    %v358 = vunpack.c.l.b16 %v319
    %v359 = vunpack.c.l.b16 %v320
    %v360 = vunpack.c.l.b16 %v321
    %v361 = vunpack.c.l.b16 %v322
    %v362 = vunpack.c.l.b16 %v323
    %v363 = vunpack.c.l.b16 %v324
    %v364 = vunpack.c.l.b16 %v325
    %v365 = vunpack.c.l.b16 %v326
    %v366 = vunpack.c.l.b16 %v327
    %v367 = vunpack.c.l.b16 %v328
    %v368 = vunpack.c.l.b16 %v329
    %v369 = vunpack.c.l.b16 %v330
    %v370 = vunpack.c.l.b16 %v331
    %v371 = vunpack.c.l.b16 %v332
    %v372 = vunpack.c.l.b16 %v333
    %v373 = vunpack.c.l.b16 %v334
    %v374 = vpack.c.b16 %v359, %v358
    %v375 = vpack.c.b16 %v361, %v360
    %v376 = vpack.c.b16 %v363, %v362
    %v377 = vpack.c.b16 %v365, %v364
    %v378 = vpack.c.b16 %v367, %v366
    %v379 = vpack.c.b16 %v369, %v368
    %v380 = vpack.c.b16 %v371, %v370
    %v381 = vpack.c.b16 %v373, %v372
    %390 = vmatprep.subr.bf16.mxu0 0
    %391 = vmatpush1.bf16.msra.mxu0 %v374
    %392 = vmatprep.subr.bf16.mxu0 0
    %393 = vmatpush1.bf16.msra.mxu0 %v375
    %394 = vmatprep.subr.bf16.mxu0 0
    %395 = vmatpush1.bf16.msra.mxu0 %v376
    %396 = vmatprep.subr.bf16.mxu0 0
    %397 = vmatpush1.bf16.msra.mxu0 %v377
    %398 = vmatprep.subr.bf16.mxu0 0
    %399 = vmatpush1.bf16.msra.mxu0 %v378
    %400 = vmatprep.subr.bf16.mxu0 0
    %401 = vmatpush1.bf16.msra.mxu0 %v379
    %402 = vmatprep.subr.bf16.mxu0 0
    %403 = vmatpush1.bf16.msra.mxu0 %v380
    %404 = vmatprep.subr.bf16.mxu0 0
    %405 = vmatpush1.bf16.msra.mxu0 %v381
    %406 = vmatprep.subr.bf16.mxu0 0
    %407 = vmatpush1.bf16.msra.mxu0 0
    %408 = vmatprep.subr.bf16.mxu0 0
    %409 = vmatpush1.bf16.msra.mxu0 0
    %410 = vmatprep.subr.bf16.mxu0 0
    %411 = vmatpush1.bf16.msra.mxu0 0
    %412 = vmatprep.subr.bf16.mxu0 0
    %413 = vmatpush1.bf16.msra.mxu0 0
    %414 = vmatprep.subr.bf16.mxu0 0
    %415 = vmatpush1.bf16.msra.mxu0 0
    %416 = vmatprep.subr.bf16.mxu0 0
    %417 = vmatpush1.bf16.msra.mxu0 0
    %418 = vmatprep.subr.bf16.mxu0 0
    %419 = vmatpush1.bf16.msra.mxu0 0
    %420 = vmatprep.subr.bf16.mxu0 0
    %421 = vmatpush1.bf16.msra.mxu0 0
    %422 = vmatprep.mubr.bf16.mxu0 0
    %423 = vmatmul.mubr.bf16.gmra.mrb[0].mxu0 %v316
    %v424 = vpop.f32.mrb[0].mxu0
    %v425 = vadd.f32 %v340, %v424
    %v426 = vpop.f32.mrb[0].mxu0
    %v427 = vpop.f32.mrb[0].mxu0
    %v428 = vadd.f32 %v340, %v427
    %v429 = vpop.f32.mrb[0].mxu0
    %430 = vmatprep.mubr.bf16.mxu0 0
    %431 = vmatmul.mubr.bf16.gmra.mrb[0].mxu0 %v317
    %v432 = vpop.f32.mrb[0].mxu0
    %v433 = vadd.f32 %v340, %v432
    %v434 = vpop.f32.mrb[0].mxu0
    %v435 = vpop.f32.mrb[0].mxu0
    %v436 = vadd.f32 %v340, %v435
    %v437 = vpop.f32.mrb[0].mxu0
    %438 = vmatprep.mubr.bf16.mxu0 0
    %439 = vmatmul.mubr.bf16.gmra.mrb[0].mxu0 %v318
    %v440 = vpop.f32.mrb[0].mxu0
    %v441 = vadd.f32 %v340, %v440
    %v442 = vpop.f32.mrb[0].mxu0
    %v443 = vpop.f32.mrb[0].mxu0
    %v444 = vpop.f32.mrb[0].mxu0
    %445 = vdwg.mxu0
    %v446 = vand.u32 2147483647, %v425
    %v447 = vand.u32 2147483647, %v428
    %v448 = vand.u32 2147483647, %v433
    %v449 = vand.u32 2147483647, %v436
    %v450 = vand.u32 2147483647, %v441
    %v451 = vadd.f32 %v446, 1.0
    %v452 = vadd.f32 %v447, 1.0
    %v453 = vadd.f32 %v448, 1.0
    %v454 = vadd.f32 %v449, 1.0
    %v455 = vadd.f32 %v450, 1.0
    %v456 = vrcp.pop %v451
    %v457 = vrcp.pop %v452
    %v458 = vrcp.pop %v453
    %v459 = vrcp.pop %v454
    %v460 = vrcp.pop %v455
    %v461 = vmul.f32 %v425, %v456
    %v462 = vmul.f32 %v428, %v457
    %v463 = vmul.f32 %v433, %v458
    %v464 = vmul.f32 %v436, %v459
    %v465 = vmul.f32 %v441, %v460
    %v466 = vpack.c.bf16 %v462, %v461
    %v467 = vpack.c.bf16 %v464, %v463
    %v468 = vpack.c.bf16 %v465, %v465
    %v469 = vld [vmem:[%s7] sm:$0xf]
    %v470 = vld [vmem:[%s7 + $0x4] sm:$0xf]
    %v471 = vld [vmem:[%s7 + $0x8] sm:$0xf]
    %v472 = vld [vmem:[%s7 + $0xc] sm:$0xf]
    %v473 = vld [vmem:[%s7 + $0x10] sm:$0xf]
    %v474 = vld [vmem:[%s7 + $0x14] sm:$0xf]
    %v475 = vld [vmem:[%s7 + $0x18] sm:$0xf]
    %v476 = vld [vmem:[%s7 + $0x1c] sm:$0xf]
    %v477 = vld [vmem:[%s7 + $0x20] sm:$0xf]
    %v478 = vld [vmem:[%s7 + $0x24] sm:$0xf]
    %v479 = vld [vmem:[%s7 + $0x28] sm:$0xf]
    %v480 = vld [vmem:[%s7 + $0x2c] sm:$0xf]
    %v481 = vld [vmem:[%s7 + $0x30] sm:$0xf]
    %v482 = vld [vmem:[%s7 + $0x34] sm:$0xf]
    %v483 = vld [vmem:[%s7 + $0x38] sm:$0xf]
    %v484 = vld [vmem:[%s7 + $0x3c] sm:$0xf]
    %v485 = vld [vmem:[%s8] sm:$0x1]
    %v487 = vlaneseq
    %v488 = vshrl.u32 %v487, 7
    %v489 = vsub.s32 0, %v488
    %v490 = vrot.slane %v485, %v489
    %v508 = vunpack.c.l.b16 %v469
    %v509 = vunpack.c.l.b16 %v470
    %v510 = vunpack.c.l.b16 %v471
    %v511 = vunpack.c.l.b16 %v472
    %v512 = vunpack.c.l.b16 %v473
    %v513 = vunpack.c.l.b16 %v474
    %v514 = vunpack.c.l.b16 %v475
    %v515 = vunpack.c.l.b16 %v476
    %v516 = vunpack.c.l.b16 %v477
    %v517 = vunpack.c.l.b16 %v478
    %v518 = vunpack.c.l.b16 %v479
    %v519 = vunpack.c.l.b16 %v480
    %v520 = vunpack.c.l.b16 %v481
    %v521 = vunpack.c.l.b16 %v482
    %v522 = vunpack.c.l.b16 %v483
    %v523 = vunpack.c.l.b16 %v484
    %v524 = vpack.c.b16 %v509, %v508
    %v525 = vpack.c.b16 %v511, %v510
    %v526 = vpack.c.b16 %v513, %v512
    %v527 = vpack.c.b16 %v515, %v514
    %v528 = vpack.c.b16 %v517, %v516
    %v529 = vpack.c.b16 %v519, %v518
    %v530 = vpack.c.b16 %v521, %v520
    %v531 = vpack.c.b16 %v523, %v522
    %540 = vmatprep.subr.bf16.mxu0 0
    %541 = vmatpush1.bf16.msra.mxu0 %v524
    %542 = vmatprep.subr.bf16.mxu0 0
    %543 = vmatpush1.bf16.msra.mxu0 %v525
    %544 = vmatprep.subr.bf16.mxu0 0
    %545 = vmatpush1.bf16.msra.mxu0 %v526
    %546 = vmatprep.subr.bf16.mxu0 0
    %547 = vmatpush1.bf16.msra.mxu0 %v527
    %548 = vmatprep.subr.bf16.mxu0 0
    %549 = vmatpush1.bf16.msra.mxu0 %v528
    %550 = vmatprep.subr.bf16.mxu0 0
    %551 = vmatpush1.bf16.msra.mxu0 %v529
    %552 = vmatprep.subr.bf16.mxu0 0
    %553 = vmatpush1.bf16.msra.mxu0 %v530
    %554 = vmatprep.subr.bf16.mxu0 0
    %555 = vmatpush1.bf16.msra.mxu0 %v531
    %556 = vmatprep.subr.bf16.mxu0 0
    %557 = vmatpush1.bf16.msra.mxu0 0
    %558 = vmatprep.subr.bf16.mxu0 0
    %559 = vmatpush1.bf16.msra.mxu0 0
    %560 = vmatprep.subr.bf16.mxu0 0
    %561 = vmatpush1.bf16.msra.mxu0 0
    %562 = vmatprep.subr.bf16.mxu0 0
    %563 = vmatpush1.bf16.msra.mxu0 0
    %564 = vmatprep.subr.bf16.mxu0 0
    %565 = vmatpush1.bf16.msra.mxu0 0
    %566 = vmatprep.subr.bf16.mxu0 0
    %567 = vmatpush1.bf16.msra.mxu0 0
    %568 = vmatprep.subr.bf16.mxu0 0
    %569 = vmatpush1.bf16.msra.mxu0 0
    %570 = vmatprep.subr.bf16.mxu0 0
    %571 = vmatpush1.bf16.msra.mxu0 0
    %572 = vmatprep.mubr.bf16.mxu0 0
    %573 = vmatmul.mubr.bf16.gmra.mrb[0].mxu0 %v466
    %v574 = vpop.f32.mrb[0].mxu0
    %v575 = vadd.f32 %v490, %v574
    %v576 = vpop.f32.mrb[0].mxu0
    %v577 = vpop.f32.mrb[0].mxu0
    %v578 = vadd.f32 %v490, %v577
    %v579 = vpop.f32.mrb[0].mxu0
    %580 = vmatprep.mubr.bf16.mxu0 0
    %581 = vmatmul.mubr.bf16.gmra.mrb[0].mxu0 %v467
    %v582 = vpop.f32.mrb[0].mxu0
    %v583 = vadd.f32 %v490, %v582
    %v584 = vpop.f32.mrb[0].mxu0
    %v585 = vpop.f32.mrb[0].mxu0
    %v586 = vadd.f32 %v490, %v585
    %v587 = vpop.f32.mrb[0].mxu0
    %588 = vmatprep.mubr.bf16.mxu0 0
    %589 = vmatmul.mubr.bf16.gmra.mrb[0].mxu0 %v468
    %v590 = vpop.f32.mrb[0].mxu0
    %v591 = vadd.f32 %v490, %v590
    %v592 = vpop.f32.mrb[0].mxu0
    %v593 = vpop.f32.mrb[0].mxu0
    %v594 = vpop.f32.mrb[0].mxu0
    %595 = vdwg.mxu0
    %vm596 = vcmask 64512
    %597 = vst.msk [vmem:[%s9] sm:$0xff] %vm596, %v575
    %598 = vst.msk [vmem:[%s9 + $0x8] sm:$0xff] %vm596, %v578
    %599 = vst.msk [vmem:[%s9 + $0x10] sm:$0xff] %vm596, %v583
    %600 = vst.msk [vmem:[%s9 + $0x18] sm:$0xff] %vm596, %v586
    %601 = vst.msk [vmem:[%s9 + $0x20] sm:$0xff] %vm596, %v591
    // Predicated region
    $region42: #{tpu_custom_call.1} parent=1 // pred_check
      _
    $region43: #{tpu_custom_call.1} parent=1 // pred_check_branch
      %603 = sbr.rel (0) target = $region45
    $region44: #{tpu_custom_call.1} parent=1 // pred_region
      _
    $region45: #{tpu_custom_call.1} parent=1 // pred_fallthru
      _
    // Predicated region
    $region46: #{tpu_custom_call.1} parent=1 // pred_check
      _
    $region47: #{tpu_custom_call.1} parent=1 // pred_check_branch
      %605 = sbr.rel (0) target = $region49
    $region48: #{tpu_custom_call.1} parent=1 // pred_region
      _
    $region49: #{tpu_custom_call.1} parent=1 // pred_fallthru
      _
    %606 = vsyncpa [#allocation3], 1

</llo_original>
